<compile_context>
chip_gen: v5e
topology: v5e:2x2
jax: 0.10.0
libtpu: 0.0.40
codegen_flags: <defaults>
</compile_context>

<pallas_src>
import functools

import jax
import jax.numpy as jnp
from jax.experimental import pallas as pl
from jax.experimental.pallas import tpu as pltpu


def _round_up(x, m):
    return (x + m - 1) // m * m


def _make_kernel(A):
    def kernel(states_t_ref, actions_ref, w1sT_ref, tabT_ref, w2T_ref,
               b2_ref, w3_ref, b3_ref, out_ref):
        states_t = states_t_ref[...]                       # [S, TILE_B] f32
        actions = actions_ref[...]                         # [1, TILE_B] int32
        tile_b = states_t.shape[1]

        # One-hot in transposed layout: [A, TILE_B].
        # NOTE: out-of-range / negative actions yield an all-zero column (zero
        # embedding); torch.nn.Embedding would raise IndexError instead.
        iota = jax.lax.broadcasted_iota(jnp.int32, (A, tile_b), 0)
        one_hot_t = (iota == actions).astype(jnp.float32)  # [A, TILE_B]

        # h1^T = W1s^T @ states^T + (emb @ W1a + b1)^T @ one_hot^T   -> [H, TILE_B]
        h1t = jnp.tanh(
            jnp.dot(w1sT_ref[...], states_t, preferred_element_type=jnp.float32)
            + jnp.dot(tabT_ref[...], one_hot_t, preferred_element_type=jnp.float32))
        # h2^T = tanh(W2^T @ h1^T + b2)                              -> [H, TILE_B]
        h2t = jnp.tanh(
            jnp.dot(w2T_ref[...], h1t, preferred_element_type=jnp.float32)
            + b2_ref[...])
        # logits^T = sum_H(h2^T * w3) + b3  (VPU mul + sublane reduce) -> [1, TILE_B]
        logits = jnp.sum(h2t * w3_ref[...], axis=0, keepdims=True) + b3_ref[...]
        out_ref[...] = jax.nn.sigmoid(logits)              # lane-dense [1, TILE_B]

    return kernel


def prep_params(params, state_dim, action_dim, hidden_dim):
    """Fold the action path (emb @ W1a + b1) and pre-transpose weights so the
    kernel runs in the batch-on-lanes layout with untransposed MXU matmuls."""
    S, A, H = state_dim, action_dim, hidden_dim
    w1s, w1a = params["w1"][:S], params["w1"][S:]
    table = params["emb"] @ w1a + params["b1"]             # [A, H]
    return {
        "w1sT": jnp.asarray(w1s.T, jnp.float32),           # [H, S]
        "tabT": jnp.asarray(table.T, jnp.float32),         # [H, A]
        "w2T":  jnp.asarray(params["w2"].T, jnp.float32),  # [H, H]
        "b2":   jnp.asarray(params["b2"].reshape(H, 1), jnp.float32),  # [H, 1]
        "w3":   jnp.asarray(params["w3"], jnp.float32),    # [H, 1]
        "b3":   jnp.asarray(params["b3"], jnp.float32),    # [1, 1]
    }


@functools.partial(jax.jit, static_argnames=("tile_b",))
def discrete_discriminator_forward(states, actions, prepped, *, tile_b=512):
    """states: [B, S] f32, actions: [B] int, prepped: dict from prep_params."""
    assert tile_b % 128 == 0
    B, S = states.shape
    H, A = prepped["tabT"].shape

    # Lane-dense batch tile: >=512 at large B (amortizes per-step overhead),
    # round_up(B,128) at small B.  VMEM never binds at these feature dims
    # (even on v7x's 64 MiB), so overhead amortization sets the tile.
    TILE_B = min(tile_b, _round_up(B, 128))
    B_pad = _round_up(B, TILE_B)
    grid = (B_pad // TILE_B,)

    # Wrapper-side layout plumbing: present batch on the lane axis.
    states_t = jnp.zeros((S, B_pad), jnp.float32).at[:, :B].set(states.T)
    actions_row = jnp.zeros((1, B_pad), jnp.int32).at[:, :B].set(
        actions.astype(jnp.int32).reshape(1, B))

    kernel = _make_kernel(A)
    const = lambda shape: pl.BlockSpec(shape, lambda i: (0, 0))  # VMEM-resident params

    out_t = pl.pallas_call(
        kernel,
        out_shape=jax.ShapeDtypeStruct((1, B_pad), jnp.float32),
        grid=grid,
        in_specs=[
            pl.BlockSpec((S, TILE_B), lambda i: (0, i)),   # states^T tile
            pl.BlockSpec((1, TILE_B), lambda i: (0, i)),   # actions tile
            const((H, S)),                                 # W1s^T
            const((H, A)),                                 # (emb@W1a+b1)^T
            const((H, H)),                                 # W2^T
            const((H, 1)),                                 # b2
            const((H, 1)),                                 # w3
            const((1, 1)),                                 # b3
        ],
        out_specs=pl.BlockSpec((1, TILE_B), lambda i: (0, i)),
        compiler_params=pltpu.CompilerParams(
            dimension_semantics=("parallel",)),            # v7x: 2 TCs; no-op elsewhere
    )(states_t, actions_row, prepped["w1sT"], prepped["tabT"], prepped["w2T"],
      prepped["b2"], prepped["w3"], prepped["b3"])

    return out_t[0, :B].reshape(B, 1)


def init_params(key, state_dim, action_dim, hidden_dim):
    """Parameters matching the PyTorch module (linear weights stored as [in, out])."""
    ks = jax.random.split(key, 7)
    S, A, H = state_dim, action_dim, hidden_dim
    init = lambda k, shape, scale: jax.random.normal(k, shape, jnp.float32) * scale
    return {
        "emb": init(ks[0], (A, S), 1.0),        # nn.Embedding weight
        "w1":  init(ks[1], (2 * S, H), 0.1),
        "b1":  init(ks[2], (1, H), 0.1),
        "w2":  init(ks[3], (H, H), 0.1),
        "b2":  init(ks[4], (1, H), 0.1),
        "w3":  init(ks[5], (H, 1), 0.1),
        "b3":  init(ks[6], (1, 1), 0.1),
    }


def reference_forward(states, actions, params):
    """Pure-JAX reference of the PyTorch forward (unfolded weights)."""
    act_emb = params["emb"][actions]                               # [B, S]
    x = jnp.concatenate([states, act_emb], axis=-1)                # [B, 2S]
    h1 = jnp.tanh(x @ params["w1"] + params["b1"])
    h2 = jnp.tanh(h1 @ params["w2"] + params["b2"])
    return jax.nn.sigmoid(h2 @ params["w3"] + params["b3"])


if __name__ == "__main__":
    state_dim, action_dim, hidden_dim = 16, 4, 32

    key = jax.random.PRNGKey(0)
    k_params, k_states, k_actions = jax.random.split(key, 3)

    params = init_params(k_params, state_dim, action_dim, hidden_dim)
    prepped = prep_params(params, state_dim, action_dim, hidden_dim)  # one-time fold/transpose

    # Small demo shape (single 128-wide tile, grid=(1,)).
    batch = 8
    states = jax.random.normal(k_states, (batch, state_dim), jnp.float32)
    actions = jax.random.randint(k_actions, (batch,), 0, action_dim, jnp.int32)

    out = discrete_discriminator_forward(states, actions, prepped)
    out = jax.block_until_ready(out)
    ref = reference_forward(states, actions, params)
    assert out.shape == (batch, 1)
    assert jnp.allclose(out, ref, atol=1e-5, rtol=1e-5)

    # Larger batch to exercise the multi-tile parallel grid path (still tiny data).
    batch2 = 1024
    k_s2, k_a2 = jax.random.split(jax.random.PRNGKey(1))
    states2 = jax.random.normal(k_s2, (batch2, state_dim), jnp.float32)
    actions2 = jax.random.randint(k_a2, (batch2,), 0, action_dim, jnp.int32)
    out2 = jax.block_until_ready(
        discrete_discriminator_forward(states2, actions2, prepped))
    ref2 = reference_forward(states2, actions2, params)
    assert out2.shape == (batch2, 1)
    assert jnp.allclose(out2, ref2, atol=1e-5, rtol=1e-5)

    print("KERNEL_OK")
</pallas_src>

<mosaic_0001>
module attributes {stable_mosaic.version = 11 : i64} {
  func.func @kernel(%arg0: i32, %arg1: memref<16x128xf32, #tpu.memory_space<vmem>>, %arg2: memref<1x128xi32, #tpu.memory_space<vmem>>, %arg3: memref<32x16xf32, #tpu.memory_space<vmem>>, %arg4: memref<32x4xf32, #tpu.memory_space<vmem>>, %arg5: memref<32x32xf32, #tpu.memory_space<vmem>>, %arg6: memref<32x1xf32, #tpu.memory_space<vmem>>, %arg7: memref<32x1xf32, #tpu.memory_space<vmem>>, %arg8: memref<1x1xf32, #tpu.memory_space<vmem>>, %arg9: memref<1x128xf32, #tpu.memory_space<vmem>>) attributes {dimension_semantics = [#tpu.dimension_semantics<parallel>], iteration_bounds = array<i64: 1>, scalar_prefetch = 0 : i64, scratch_operands = 0 : i64, tpu.core_type = #tpu.core_type<tc>, window_params = [{transform_indices = @transform_0, window_bounds = array<i64: 16, 128>}, {transform_indices = @transform_1, window_bounds = array<i64: 1, 128>}, {pipeline_mode = #tpu.pipeline_mode<synchronous>, transform_indices = @transform_2, window_bounds = array<i64: 32, 16>}, {pipeline_mode = #tpu.pipeline_mode<synchronous>, transform_indices = @transform_3, window_bounds = array<i64: 32, 4>}, {pipeline_mode = #tpu.pipeline_mode<synchronous>, transform_indices = @transform_4, window_bounds = array<i64: 32, 32>}, {pipeline_mode = #tpu.pipeline_mode<synchronous>, transform_indices = @transform_5, window_bounds = array<i64: 32, 1>}, {pipeline_mode = #tpu.pipeline_mode<synchronous>, transform_indices = @transform_6, window_bounds = array<i64: 32, 1>}, {pipeline_mode = #tpu.pipeline_mode<synchronous>, transform_indices = @transform_7, window_bounds = array<i64: 1, 1>}, {transform_indices = @transform_8, window_bounds = array<i64: 1, 128>}]} {
    %c0 = arith.constant 0 : index
    %c0_0 = arith.constant 0 : index
    %0 = vector.load %arg1[%c0, %c0_0] : memref<16x128xf32, #tpu.memory_space<vmem>>, vector<16x128xf32>
    %c0_1 = arith.constant 0 : index
    %c0_2 = arith.constant 0 : index
    %1 = vector.load %arg2[%c0_1, %c0_2] : memref<1x128xi32, #tpu.memory_space<vmem>>, vector<1x128xi32>
    %2 = tpu.iota {dimensions = array<i32: 0>} : vector<4x128xi32>
    %3 = vector.broadcast %1 : vector<1x128xi32> to vector<4x128xi32>
    %4 = arith.cmpi eq, %2, %3 : vector<4x128xi32>
    %5 = arith.extui %4 : vector<4x128xi1> to vector<4x128xi32>
    %6 = arith.sitofp %5 : vector<4x128xi32> to vector<4x128xf32>
    %c0_3 = arith.constant 0 : index
    %c0_4 = arith.constant 0 : index
    %7 = vector.load %arg3[%c0_3, %c0_4] : memref<32x16xf32, #tpu.memory_space<vmem>>, vector<32x16xf32>
    %cst = arith.constant dense<0.000000e+00> : vector<32x128xf32>
    %8 = tpu.matmul %7, %0, %cst {dimension_numbers = #tpu.dot_dimension_numbers<[1], [0], [0], [1], [0, 0, 1, 1], [], []>} : vector<32x16xf32>, vector<16x128xf32>, vector<32x128xf32> -> vector<32x128xf32>
    %c0_5 = arith.constant 0 : index
    %c0_6 = arith.constant 0 : index
    %9 = vector.load %arg4[%c0_5, %c0_6] : memref<32x4xf32, #tpu.memory_space<vmem>>, vector<32x4xf32>
    %cst_7 = arith.constant dense<0.000000e+00> : vector<32x128xf32>
    %10 = tpu.matmul %9, %6, %cst_7 {dimension_numbers = #tpu.dot_dimension_numbers<[1], [0], [0], [1], [0, 0, 1, 1], [], []>} : vector<32x4xf32>, vector<4x128xf32>, vector<32x128xf32> -> vector<32x128xf32>
    %11 = arith.addf %8, %10 : vector<32x128xf32>
    %12 = math.tanh %11 : vector<32x128xf32>
    %c0_8 = arith.constant 0 : index
    %c0_9 = arith.constant 0 : index
    %13 = vector.load %arg5[%c0_8, %c0_9] : memref<32x32xf32, #tpu.memory_space<vmem>>, vector<32x32xf32>
    %cst_10 = arith.constant dense<0.000000e+00> : vector<32x128xf32>
    %14 = tpu.matmul %13, %12, %cst_10 {dimension_numbers = #tpu.dot_dimension_numbers<[1], [0], [0], [1], [0, 0, 1, 1], [], []>} : vector<32x32xf32>, vector<32x128xf32>, vector<32x128xf32> -> vector<32x128xf32>
    %c0_11 = arith.constant 0 : index
    %c0_12 = arith.constant 0 : index
    %15 = vector.load %arg6[%c0_11, %c0_12] : memref<32x1xf32, #tpu.memory_space<vmem>>, vector<32x1xf32>
    %16 = vector.broadcast %15 : vector<32x1xf32> to vector<32x128xf32>
    %17 = arith.addf %14, %16 : vector<32x128xf32>
    %18 = math.tanh %17 : vector<32x128xf32>
    %c0_13 = arith.constant 0 : index
    %c0_14 = arith.constant 0 : index
    %19 = vector.load %arg7[%c0_13, %c0_14] : memref<32x1xf32, #tpu.memory_space<vmem>>, vector<32x1xf32>
    %20 = vector.broadcast %19 : vector<32x1xf32> to vector<32x128xf32>
    %21 = arith.mulf %18, %20 : vector<32x128xf32>
    %cst_15 = arith.constant dense<0.000000e+00> : vector<128xf32>
    %22 = vector.multi_reduction <add>, %21, %cst_15 [0] : vector<32x128xf32> to vector<128xf32>
    %23 = vector.shape_cast %22 : vector<128xf32> to vector<1x128xf32>
    %c0_16 = arith.constant 0 : index
    %c0_17 = arith.constant 0 : index
    %24 = vector.load %arg8[%c0_16, %c0_17] : memref<1x1xf32, #tpu.memory_space<vmem>>, vector<1x1xf32>
    %25 = vector.broadcast %24 : vector<1x1xf32> to vector<1x128xf32>
    %26 = arith.addf %23, %25 : vector<1x128xf32>
    %27 = arith.negf %26 : vector<1x128xf32>
    %28 = math.exp %27 : vector<1x128xf32>
    %cst_18 = arith.constant 1.000000e+00 : f32
    %29 = vector.broadcast %cst_18 : f32 to vector<1x128xf32>
    %30 = arith.addf %29, %28 : vector<1x128xf32>
    %31 = arith.divf %29, %30 : vector<1x128xf32>
    %c0_19 = arith.constant 0 : index
    %c0_20 = arith.constant 0 : index
    %32 = vector.load %arg9[%c0_19, %c0_20] : memref<1x128xf32, #tpu.memory_space<vmem>>, vector<1x128xf32>
    tpu.vector_store %arg9[%c0_19, %c0_20], %31 {strides = array<i32>} : memref<1x128xf32, #tpu.memory_space<vmem>>, vector<1x128xf32>,
    return
  }
  func.func @transform_0(%arg0: i32) -> (i32, i32) {
    %c0_i32 = arith.constant 0 : i32
    %c0_i32_0 = arith.constant 0 : i32
    return %c0_i32, %arg0 : i32, i32
  }
  func.func @transform_1(%arg0: i32) -> (i32, i32) {
    %c0_i32 = arith.constant 0 : i32
    %c0_i32_0 = arith.constant 0 : i32
    return %c0_i32, %arg0 : i32, i32
  }
  func.func @transform_2(%arg0: i32) -> (i32, i32) {
    %c0_i32 = arith.constant 0 : i32
    %c0_i32_0 = arith.constant 0 : i32
    %c0_i32_1 = arith.constant 0 : i32
    return %c0_i32, %c0_i32_0 : i32, i32
  }
  func.func @transform_3(%arg0: i32) -> (i32, i32) {
    %c0_i32 = arith.constant 0 : i32
    %c0_i32_0 = arith.constant 0 : i32
    %c0_i32_1 = arith.constant 0 : i32
    return %c0_i32, %c0_i32_0 : i32, i32
  }
  func.func @transform_4(%arg0: i32) -> (i32, i32) {
    %c0_i32 = arith.constant 0 : i32
    %c0_i32_0 = arith.constant 0 : i32
    %c0_i32_1 = arith.constant 0 : i32
    return %c0_i32, %c0_i32_0 : i32, i32
  }
  func.func @transform_5(%arg0: i32) -> (i32, i32) {
    %c0_i32 = arith.constant 0 : i32
    %c0_i32_0 = arith.constant 0 : i32
    %c0_i32_1 = arith.constant 0 : i32
    return %c0_i32, %c0_i32_0 : i32, i32
  }
  func.func @transform_6(%arg0: i32) -> (i32, i32) {
    %c0_i32 = arith.constant 0 : i32
    %c0_i32_0 = arith.constant 0 : i32
    %c0_i32_1 = arith.constant 0 : i32
    return %c0_i32, %c0_i32_0 : i32, i32
  }
  func.func @transform_7(%arg0: i32) -> (i32, i32) {
    %c0_i32 = arith.constant 0 : i32
    %c0_i32_0 = arith.constant 0 : i32
    %c0_i32_1 = arith.constant 0 : i32
    return %c0_i32, %c0_i32_0 : i32, i32
  }
  func.func @transform_8(%arg0: i32) -> (i32, i32) {
    %c0_i32 = arith.constant 0 : i32
    %c0_i32_0 = arith.constant 0 : i32
    return %c0_i32, %arg0 : i32, i32
  }
}

</mosaic_0001>

<llo_original>
// kernel: discrete_discriminator_forward.1
$region0: #{discrete_discriminator_forward.1}
  #allocation0 [shape = 'u32[]', space=smem, size = 0x4, offset = 0x4, fixed_abs, tag = 'smem constant byte address 0x4 - core index']
  #allocation1 [shape = 'u32[72,128]{1,0:T(1,128)}', space=vmem, size = 0x9000, scoped, tag = 'internal scratch']
  #allocation2 [shape = 'f32[1,1]{1,0:T(1,128)S(1)}', space=vmem, size = 0x200, scoped, tag = 'scoped memory for discrete_discriminator_forward.1']
  %s0 = inlined_call_operand.vmem [shape: f32[16,128], index: 0, kind: input, shape index: {}]
  %s1 = inlined_call_operand.vmem [shape: s32[1,128], index: 1, kind: input, shape index: {}]
  %s2 = inlined_call_operand.vmem [shape: f32[32,16], index: 2, kind: input, shape index: {}]
  %s3 = inlined_call_operand.vmem [shape: f32[32,4], index: 3, kind: input, shape index: {}]
  %s4 = inlined_call_operand.vmem [shape: f32[32,32], index: 4, kind: input, shape index: {}]
  %s5 = inlined_call_operand.vmem [shape: f32[32,1], index: 5, kind: input, shape index: {}]
  %s6 = inlined_call_operand.vmem [shape: f32[32,1], index: 6, kind: input, shape index: {}]
  %s7 = inlined_call_operand.<no memory space> [shape: f32[1,1], index: 7, kind: input, shape index: {}]
  %s8 = inlined_call_operand.vmem [shape: f32[1,128], index: 8, kind: output, shape index: {}]
  %s9 = sld [smem:[#allocation0]]
  $region42: #{discrete_discriminator_forward.1} parent=0
    _
  %s11 = ssub.s32 1, %s9
  %s12 = scalar_select 0, %s11, %s9
  %v13 = vstv %s7
  %14 = vst [vmem:[#allocation2] sm:$0x1] %v13
  // Predicated region
  $region2: #{discrete_discriminator_forward.1} parent=0 // pred_check
    _
  $region3: #{discrete_discriminator_forward.1} parent=0 // pred_check_branch
    %16 = sbr.rel (0) target = $region5
  $region4: #{discrete_discriminator_forward.1} parent=0 // pred_region
    _
  $region5: #{discrete_discriminator_forward.1} parent=0 // pred_fallthru
    _
  // Predicated region
  $region6: #{discrete_discriminator_forward.1} parent=0 // pred_check
    _
  $region7: #{discrete_discriminator_forward.1} parent=0 // pred_check_branch
    %18 = sbr.rel (0) target = $region9
  $region8: #{discrete_discriminator_forward.1} parent=0 // pred_region
    _
  $region9: #{discrete_discriminator_forward.1} parent=0 // pred_fallthru
    _
  // Predicated region
  $region10: #{discrete_discriminator_forward.1} parent=0 // pred_check
    _
  $region11: #{discrete_discriminator_forward.1} parent=0 // pred_check_branch
    %20 = sbr.rel (0) target = $region13
  $region12: #{discrete_discriminator_forward.1} parent=0 // pred_region
    _
  $region13: #{discrete_discriminator_forward.1} parent=0 // pred_fallthru
    _
  // Predicated region
  $region14: #{discrete_discriminator_forward.1} parent=0 // pred_check
    _
  $region15: #{discrete_discriminator_forward.1} parent=0 // pred_check_branch
    %22 = sbr.rel (0) target = $region17
  $region16: #{discrete_discriminator_forward.1} parent=0 // pred_region
    _
  $region17: #{discrete_discriminator_forward.1} parent=0 // pred_fallthru
    _
  // Predicated region
  $region18: #{discrete_discriminator_forward.1} parent=0 // pred_check
    _
  $region19: #{discrete_discriminator_forward.1} parent=0 // pred_check_branch
    %24 = sbr.rel (0) target = $region21
  $region20: #{discrete_discriminator_forward.1} parent=0 // pred_region
    _
  $region21: #{discrete_discriminator_forward.1} parent=0 // pred_fallthru
    _
  // Predicated region
  $region22: #{discrete_discriminator_forward.1} parent=0 // pred_check
    _
  $region23: #{discrete_discriminator_forward.1} parent=0 // pred_check_branch
    %26 = sbr.rel (0) target = $region25
  $region24: #{discrete_discriminator_forward.1} parent=0 // pred_region
    _
  $region25: #{discrete_discriminator_forward.1} parent=0 // pred_fallthru
    _
  // Predicated region
  $region26: #{discrete_discriminator_forward.1} parent=0 // pred_check
    _
  $region27: #{discrete_discriminator_forward.1} parent=0 // pred_check_branch
    %28 = sbr.rel (0) target = $region29
  $region28: #{discrete_discriminator_forward.1} parent=0 // pred_region
    _
  $region29: #{discrete_discriminator_forward.1} parent=0 // pred_fallthru
    _
  // Predicated region
  $region30: #{discrete_discriminator_forward.1} parent=0 // pred_check
    _
  $region31: #{discrete_discriminator_forward.1} parent=0 // pred_check_branch
    %30 = sbr.rel (0) target = $region33
  $region32: #{discrete_discriminator_forward.1} parent=0 // pred_region
    _
  $region33: #{discrete_discriminator_forward.1} parent=0 // pred_fallthru
    _
  %v31 = vld [vmem:[%s0] sm:$0xff]
  %v32 = vld [vmem:[%s0 + $0x8] sm:$0xff]
  %v33 = vld [vmem:[%s1] sm:$0x1]
  %v34 = vlaneseq
  %v35 = vshrl.u32 %v34, 7
  %v36 = vperm.slane %v33, 0
  %vm37 = vcmp.eq.s32.totalorder %v35, %v36
  %v38 = vsel %vm37, 1, 0
  %v39 = vcvt.s32.f32 %v38
  %v40 = vld [vmem:[%s2] sm:$0xff]
  %v41 = vld [vmem:[%s2 + $0x8] sm:$0xff]
  %v42 = vld [vmem:[%s2 + $0x10] sm:$0xff]
  %v43 = vld [vmem:[%s2 + $0x18] sm:$0xff]
  %v44 = vld [vmem:[%s3] sm:$0xff]
  %v45 = vld [vmem:[%s3 + $0x8] sm:$0xff]
  %v46 = vld [vmem:[%s3 + $0x10] sm:$0xff]
  %v47 = vld [vmem:[%s3 + $0x18] sm:$0xff]
  %vm48 = vcmask 31744
  %v50 = vsel %vm48, %v44, 0
  %v53 = vsel %vm48, %v45, 0
  %v56 = vsel %vm48, %v46, 0
  %v59 = vsel %vm48, %v47, 0
  %vm61 = vcmask 1043456
  %v63 = vsel %vm61, %v39, 0
  %65 = vmatpush.msra.mxu0 0.0
  %66 = vmatpush.msra.mxu0 0.0
  %67 = vmatpush.msra.mxu0 0.0
  %68 = vmatpush.msra.mxu0 0.0
  %69 = vmatpush.msra.mxu0 0.0
  %70 = vmatpush.msra.mxu0 0.0
  %71 = vmatpush.msra.mxu0 0.0
  %72 = vmatpush.msra.mxu0 0.0
  %73 = vmatpush.msra.mxu0 0.0
  %74 = vmatpush.msra.mxu0 0.0
  %75 = vmatpush.msra.mxu0 0.0
  %76 = vmatpush.msra.mxu0 0.0
  %77 = vmatpush.msra.mxu0 0.0
  %78 = vmatpush.msra.mxu0 0.0
  %79 = vmatpush.msra.mxu0 0.0
  %80 = vmatpush.msra.mxu0 %v63
  %81 = vmatmul.f32.gmra.mxu0 %v50
  %v82 = vpop.f32.mrf.mxu0
  %v83 = vadd.f32 0.0, %v82
  %84 = vmatmul.f32.gmra.mxu0 %v53
  %v85 = vpop.f32.mrf.mxu0
  %v86 = vadd.f32 0.0, %v85
  %87 = vmatmul.f32.gmra.mxu0 %v56
  %v88 = vpop.f32.mrf.mxu0
  %v89 = vadd.f32 0.0, %v88
  %90 = vmatmul.f32.gmra.mxu0 %v59
  %v91 = vpop.f32.mrf.mxu0
  %v92 = vadd.f32 0.0, %v91
  %93 = vdwg.mxu0
  %vm94 = vcmask 130048
  %v96 = vsel %vm94, %v40, 0
  %v99 = vsel %vm94, %v41, 0
  %v102 = vsel %vm94, %v42, 0
  %v105 = vsel %vm94, %v43, 0
  %107 = vmatpush.msra.mxu0 0.0
  %108 = vmatpush.msra.mxu0 0.0
  %109 = vmatpush.msra.mxu0 0.0
  %110 = vmatpush.msra.mxu0 0.0
  %111 = vmatpush.msra.mxu0 0.0
  %112 = vmatpush.msra.mxu0 0.0
  %113 = vmatpush.msra.mxu0 0.0
  %114 = vmatpush.msra.mxu0 0.0
  %115 = vmatpush.msra.mxu0 0.0
  %116 = vmatpush.msra.mxu0 0.0
  %117 = vmatpush.msra.mxu0 0.0
  %118 = vmatpush.msra.mxu0 0.0
  %119 = vmatpush.msra.mxu0 0.0
  %120 = vmatpush.msra.mxu0 0.0
  %121 = vmatpush.msra.mxu0 %v32
  %122 = vmatpush.msra.mxu0 %v31
  %123 = vmatmul.f32.gmra.mxu0 %v96
  %v124 = vpop.f32.mrf.mxu0
  %v125 = vadd.f32 %v83, %v124
  %126 = vmatmul.f32.gmra.mxu0 %v99
  %v127 = vpop.f32.mrf.mxu0
  %v128 = vadd.f32 %v86, %v127
  %129 = vmatmul.f32.gmra.mxu0 %v102
  %v130 = vpop.f32.mrf.mxu0
  %v131 = vadd.f32 %v89, %v130
  %132 = vmatmul.f32.gmra.mxu0 %v105
  %v133 = vpop.f32.mrf.mxu0
  %v134 = vadd.f32 %v92, %v133
  %135 = vdwg.mxu0
  %v136 = vtanh.pop %v125
  %v137 = vtanh.pop %v128
  %v138 = vtanh.pop %v131
  %v139 = vtanh.pop %v134
  %v140 = vld [vmem:[%s4] sm:$0xff]
  %v141 = vld [vmem:[%s4 + $0x8] sm:$0xff]
  %v142 = vld [vmem:[%s4 + $0x10] sm:$0xff]
  %v143 = vld [vmem:[%s4 + $0x18] sm:$0xff]
  %v144 = vld [vmem:[%s5] sm:$0xff]
  %v145 = vld [vmem:[%s5 + $0x8] sm:$0xff]
  %v146 = vld [vmem:[%s5 + $0x10] sm:$0xff]
  %v147 = vld [vmem:[%s5 + $0x18] sm:$0xff]
  %149 = vset.pattern.permute.xlu0 0
  %150 = vperm.xlu0 %149, %v144
  %v151 = vpop.permute.xlu0 %150
  %154 = vset.pattern.permute.xlu0 0
  %155 = vperm.xlu0 %154, %v145
  %v156 = vpop.permute.xlu0 %155
  %159 = vset.pattern.permute.xlu0 0
  %160 = vperm.xlu0 %159, %v146
  %v161 = vpop.permute.xlu0 %160
  %164 = vset.pattern.permute.xlu0 0
  %165 = vperm.xlu0 %164, %v147
  %v166 = vpop.permute.xlu0 %165
  %vm168 = vcmask 261120
  %v170 = vsel %vm168, %v140, 0
  %v173 = vsel %vm168, %v141, 0
  %v176 = vsel %vm168, %v142, 0
  %v179 = vsel %vm168, %v143, 0
  %181 = vmatpush.msra.mxu0 0.0
  %182 = vmatpush.msra.mxu0 0.0
  %183 = vmatpush.msra.mxu0 0.0
  %184 = vmatpush.msra.mxu0 0.0
  %185 = vmatpush.msra.mxu0 0.0
  %186 = vmatpush.msra.mxu0 0.0
  %187 = vmatpush.msra.mxu0 0.0
  %188 = vmatpush.msra.mxu0 0.0
  %189 = vmatpush.msra.mxu0 0.0
  %190 = vmatpush.msra.mxu0 0.0
  %191 = vmatpush.msra.mxu0 0.0
  %192 = vmatpush.msra.mxu0 0.0
  %193 = vmatpush.msra.mxu0 %v139
  %194 = vmatpush.msra.mxu0 %v138
  %195 = vmatpush.msra.mxu0 %v137
  %196 = vmatpush.msra.mxu0 %v136
  %197 = vmatmul.f32.gmra.mxu0 %v170
  %v198 = vpop.f32.mrf.mxu0
  %v199 = vadd.f32 %v151, %v198
  %200 = vmatmul.f32.gmra.mxu0 %v173
  %v201 = vpop.f32.mrf.mxu0
  %v202 = vadd.f32 %v156, %v201
  %203 = vmatmul.f32.gmra.mxu0 %v176
  %v204 = vpop.f32.mrf.mxu0
  %v205 = vadd.f32 %v161, %v204
  %206 = vmatmul.f32.gmra.mxu0 %v179
  %v207 = vpop.f32.mrf.mxu0
  %v208 = vadd.f32 %v166, %v207
  %209 = vdwg.mxu0
  %v210 = vtanh.pop %v199
  %v211 = vtanh.pop %v202
  %v212 = vtanh.pop %v205
  %v213 = vtanh.pop %v208
  %v214 = vld [vmem:[%s6] sm:$0xff]
  %v215 = vld [vmem:[%s6 + $0x8] sm:$0xff]
  %v216 = vld [vmem:[%s6 + $0x10] sm:$0xff]
  %v217 = vld [vmem:[%s6 + $0x18] sm:$0xff]
  %219 = vset.pattern.permute.xlu0 0
  %220 = vperm.xlu0 %219, %v214
  %v221 = vpop.permute.xlu0 %220
  %224 = vset.pattern.permute.xlu0 0
  %225 = vperm.xlu0 %224, %v215
  %v226 = vpop.permute.xlu0 %225
  %229 = vset.pattern.permute.xlu0 0
  %230 = vperm.xlu0 %229, %v216
  %v231 = vpop.permute.xlu0 %230
  %234 = vset.pattern.permute.xlu0 0
  %235 = vperm.xlu0 %234, %v217
  %v236 = vpop.permute.xlu0 %235
  %v238 = vmul.f32 %v210, %v221
  %v239 = vmul.f32 %v211, %v226
  %v240 = vmul.f32 %v212, %v231
  %v241 = vmul.f32 %v213, %v236
  %v242 = vadd.f32 %v238, %v239
  %v243 = vadd.f32 %v242, %v240
  %v244 = vadd.f32 %v243, %v241
  %v245 = vrot.slane %v244, 4
  %v246 = vadd.f32 %v244, %v245
  %v247 = vrot.slane %v246, 2
  %v248 = vadd.f32 %v246, %v247
  %v249 = vrot.slane %v248, 1
  %v250 = vadd.f32 %v248, %v249
  %v251 = vld [vmem:[#allocation2] sm:$0x1]
  %253 = vset.pattern.permute.xlu0 0
  %254 = vperm.xlu0 %253, %v251
  %v255 = vpop.permute.xlu0 %254
  %v257 = vperm.slane %v255, 0
  %v258 = vadd.f32 %v250, %v257
  %v259 = vxor.u32 %v258, 2147483648
  %v260 = vmul.f32 %v259, 1.442695
  %v261 = vpow.pop %v260
  %v262 = vadd.f32 %v261, 1.0
  %v263 = vrcp.pop %v262
  %v264 = vmul.f32 %v262, %v263
  %v265 = vsub.f32 1.0, %v264
  %v266 = vmul.f32 %v263, %v265
  %v267 = vadd.f32 %v263, %v266
  %vm268 = vweird.f32 %v262
  %vm269 = vweird.f32 %v263
  %vm270 = vmor %vm268, %vm269
  %v271 = vsel %vm270, %v263, %v267
  %v272 = vand.u32 2147483647, %v262
  %vm273 = vcmp.eq.f32.partialorder %v272, 8.507059e+37
  %v274 = vand.u32 %v262, 2147483648
  %v275 = vor.u32 1.1754944e-38, %v274
  %v276 = vsel %vm273, %v275, %v271
  %v277 = vmul.f32 1.0, %v276
  %278 = vst [vmem:[%s8] sm:$0x1] %v277
  // Predicated region
  $region34: #{discrete_discriminator_forward.1} parent=0 // pred_check
    _
  $region35: #{discrete_discriminator_forward.1} parent=0 // pred_check_branch
    %280 = sbr.rel (0) target = $region37
  $region36: #{discrete_discriminator_forward.1} parent=0 // pred_region
    _
  $region37: #{discrete_discriminator_forward.1} parent=0 // pred_fallthru
    _
  // Predicated region
  $region38: #{discrete_discriminator_forward.1} parent=0 // pred_check
    _
  $region39: #{discrete_discriminator_forward.1} parent=0 // pred_check_branch
    %282 = sbr.rel (0) target = $region41
  $region40: #{discrete_discriminator_forward.1} parent=0 // pred_region
    _
  $region41: #{discrete_discriminator_forward.1} parent=0 // pred_fallthru
    _

</llo_original>
